<compile_context>
chip_gen: v5e
topology: v5e:2x2
jax: 0.10.0
libtpu: 0.0.40
codegen_flags: <defaults>
</compile_context>

<pallas_src>
import functools

import jax
import jax.numpy as jnp
from jax.experimental import pallas as pl
from jax.experimental.pallas import tpu as pltpu


# Shared tap-order contract between kernel (RHS build) and wrapper (LHS fusion).
_OFFSETS = tuple((rh, rw) for rh in range(3) for rw in range(3))   # 9 distinct (rh, rw)
# output parity -> {padded-row offset rh: kernel tap index kh}; same table along width.
_ROW_TAPS = {0: {1: 1, 0: 3},
             1: {2: 0, 1: 2}}


def _round_up(x, m):
    return ((x + m - 1) // m) * m


def _pick_nb(n_imgs, per_img_bytes, budget_bytes=8 << 20, min_steps=2):
    """Images per grid step: fill ~budget_bytes of VMEM but keep >=min_steps grid steps."""
    cap = budget_bytes // max(per_img_bytes, 1)
    if n_imgs >= min_steps:
        cap = min(cap, n_imgs // min_steps)     # v7x: keep both TensorCores fed
    cap = max(1, min(int(cap), n_imgs))
    nb = 1
    for d in range(1, cap + 1):                 # largest divisor of n_imgs <= cap
        if n_imgs % d == 0:
            nb = d
    return nb


def _convT_kernel(xflat_ref, w_ref, b_ref, out_ref, rhs_ref, *, Wp, Nb):
    # xflat_ref: (Nb, Cin, Lp_pad)   zero-padded channels-first input, rows flattened
    # w_ref:     (4*Cout, 9*Cin)     fused per-parity weights (zero blocks for unused taps)
    # b_ref:     (4*Cout, 1)
    # out_ref:   (Nb, 4*Cout, L_pad) per-parity "wide" result (parity-major rows)
    # rhs_ref:   (9*Cin, L_pad)      VMEM scratch: de-duplicated 9-tap im2col slab
    Cin = xflat_ref.shape[1]
    L_pad = rhs_ref.shape[1]
    bias = b_ref[...]                           # (4*Cout, 1) -> lane-broadcast add

    for n in range(Nb):                         # unrolled; Nb images per grid step
        # Build the (9*Cin, L_pad) RHS: each distinct tap is one contiguous lane slice of
        # the flattened padded input (static offsets, no gathers / relayouts).
        for t, (rh, rw) in enumerate(_OFFSETS):
            start = rh * Wp + rw
            rhs_ref[t * Cin:(t + 1) * Cin, :] = xflat_ref[n, :, start:start + L_pad]
        # ONE MXU matmul per image: (4*Cout, 9*Cin) @ (9*Cin, L_pad), f32 accumulation.
        acc = jnp.dot(w_ref[...], rhs_ref[...], preferred_element_type=jnp.float32)
        out_ref[n] = (acc + bias).astype(out_ref.dtype)


def upsample_layer(x_nchw, weight, bias):
    """Matches nn.ConvTranspose2d(Cin, Cout, kernel_size=4, stride=2, padding=1).

    x_nchw: (N, Cin, H, W); weight: (Cin, Cout, 4, 4); bias: (Cout,)
    returns: (N, Cout, 2H, 2W)
    """
    N, Cin, H, W = x_nchw.shape
    Cout = weight.shape[1]
    assert weight.shape == (Cin, Cout, 4, 4)
    dtype = x_nchw.dtype

    Wp = W + 2
    L = H * Wp
    L_pad = _round_up(L, 128)                                  # lane-dense matmul N / stores
    Lp = (H + 3) * Wp
    Lp_pad = _round_up(max(Lp, 2 * Wp + 2 + L_pad), 128)       # every tap slice in bounds

    # Pad rows by (1, 2) and cols by (1, 1), flatten spatial dims row-major (free reshape),
    # then zero-pad the flat length up to Lp_pad.
    xpad = jnp.pad(x_nchw, ((0, 0), (0, 0), (1, 2), (1, 1)))
    xflat = jnp.pad(xpad.reshape(N, Cin, Lp), ((0, 0), (0, 0), (0, Lp_pad - Lp)))

    # Pre-fuse the weights into the (4*Cout, 9*Cin) LHS the kernel consumes.  Row blocks are
    # parity-major (ph*2+pw); column blocks follow _OFFSETS (same order as the kernel RHS).
    blocks = []
    for ph in range(2):
        for pw in range(2):
            cols = []
            for (rh, rw) in _OFFSETS:
                kh = _ROW_TAPS[ph].get(rh)
                kw = _ROW_TAPS[pw].get(rw)
                if kh is None or kw is None:
                    cols.append(jnp.zeros((Cout, Cin), dtype))
                else:
                    cols.append(weight[:, :, kh, kw].T.astype(dtype))   # (Cout, Cin)
            blocks.append(jnp.concatenate(cols, axis=1))                # (Cout, 9*Cin)
    w_fused = jnp.concatenate(blocks, axis=0)                           # (4*Cout, 9*Cin)
    b_fused = jnp.tile(bias.astype(dtype).reshape(1, Cout), (4, 1)).reshape(4 * Cout, 1)

    # Images per grid step: per-image double-buffered block bytes against an 8 MiB budget.
    bpe = x_nchw.dtype.itemsize
    per_img_bytes = bpe * (2 * Cin * Lp_pad + 2 * 4 * Cout * L_pad)
    Nb = _pick_nb(N, per_img_bytes)
    grid = (N // Nb,)

    kernel = functools.partial(_convT_kernel, Wp=Wp, Nb=Nb)
    out = pl.pallas_call(
        kernel,
        out_shape=jax.ShapeDtypeStruct((N, 4 * Cout, L_pad), dtype),
        grid=grid,
        in_specs=[
            pl.BlockSpec((Nb, Cin, Lp_pad), lambda n: (n, 0, 0)),
            pl.BlockSpec((4 * Cout, 9 * Cin), lambda n: (0, 0)),
            pl.BlockSpec((4 * Cout, 1), lambda n: (0, 0)),
        ],
        out_specs=pl.BlockSpec((Nb, 4 * Cout, L_pad), lambda n: (n, 0, 0)),
        scratch_shapes=[pltpu.VMEM((9 * Cin, L_pad), dtype)],
        compiler_params=pltpu.CompilerParams(
            dimension_semantics=("parallel",),
            vmem_limit_bytes=32 * 1024 * 1024),
    )(xflat, w_fused, b_fused)

    # Drop padded lanes / garbage wide columns, then interleave the 4 parity planes into
    # (N, Cout, 2H, 2W).
    # TODO(synk): the stride-2 pixel interleave remains one XLA layout pass over the output;
    # a strided lane scatter is not expressible from the kernel's out BlockSpec, and an
    # in-kernel XLU interleave was judged too lowering-risky here.
    y = out[..., :L].reshape(N, 2, 2, Cout, H, Wp)[..., :W]    # (N, ph, pw, Cout, H, W)
    y = jnp.transpose(y, (0, 3, 4, 1, 5, 2))                   # (N, Cout, H, ph, W, pw)
    return y.reshape(N, Cout, 2 * H, 2 * W)


def _reference(x, weight, bias):
    # ConvTranspose2d == lhs-dilated correlation with spatially flipped kernel, pad = k-1-p = 2
    w = jnp.transpose(jnp.flip(weight, axis=(2, 3)), (1, 0, 2, 3))  # (Cout, Cin, 4, 4)
    y = jax.lax.conv_general_dilated(
        x, w, window_strides=(1, 1), padding=((2, 2), (2, 2)),
        lhs_dilation=(2, 2), dimension_numbers=("NCHW", "OIHW", "NCHW"))
    return y + bias[None, :, None, None]


if __name__ == "__main__":
    key = jax.random.PRNGKey(0)
    k1, k2, k3 = jax.random.split(key, 3)

    N, Cin, Cout, H, W = 2, 4, 8, 16, 16
    x = jax.random.normal(k1, (N, Cin, H, W), jnp.float32)

    # Deterministic synthetic parameters (shapes per nn.ConvTranspose2d: (Cin, Cout, kH, kW))
    fan_in = Cin * 4 * 4
    bound = 1.0 / (fan_in ** 0.5)
    weight = jax.random.uniform(k2, (Cin, Cout, 4, 4), jnp.float32, -bound, bound)
    bias = jax.random.uniform(k3, (Cout,), jnp.float32, -bound, bound)

    out = jax.block_until_ready(upsample_layer(x, weight, bias))
    ref = _reference(x, weight, bias)

    assert out.shape == (N, Cout, 2 * H, 2 * W)
    err = float(jnp.max(jnp.abs(out - ref)))
    assert jnp.allclose(out, ref, atol=1e-4, rtol=1e-4), err
    print("KERNEL_OK")
</pallas_src>

<mosaic_0001>
module attributes {stable_mosaic.version = 11 : i64} {
  func.func @_convT_kernel(%arg0: i32, %arg1: memref<1x4x512xf32, #tpu.memory_space<vmem>>, %arg2: memref<32x36xf32, #tpu.memory_space<vmem>>, %arg3: memref<32x1xf32, #tpu.memory_space<vmem>>, %arg4: memref<1x32x384xf32, #tpu.memory_space<vmem>>, %arg5: memref<36x384xf32, #tpu.memory_space<vmem>>) attributes {dimension_semantics = [#tpu.dimension_semantics<parallel>], iteration_bounds = array<i64: 2>, scalar_prefetch = 0 : i64, scratch_operands = 1 : i64, tpu.core_type = #tpu.core_type<tc>, window_params = [{transform_indices = @transform_0, window_bounds = array<i64: 1, 4, 512>}, {pipeline_mode = #tpu.pipeline_mode<synchronous>, transform_indices = @transform_1, window_bounds = array<i64: 32, 36>}, {pipeline_mode = #tpu.pipeline_mode<synchronous>, transform_indices = @transform_2, window_bounds = array<i64: 32, 1>}, {transform_indices = @transform_3, window_bounds = array<i64: 1, 32, 384>}]} {
    %c0 = arith.constant 0 : index
    %c0_0 = arith.constant 0 : index
    %0 = vector.load %arg3[%c0, %c0_0] : memref<32x1xf32, #tpu.memory_space<vmem>>, vector<32x1xf32>
    %c0_1 = arith.constant 0 : index
    %c0_2 = arith.constant 0 : index
    %c0_3 = arith.constant 0 : index
    %1 = vector.load %arg1[%c0_1, %c0_2, %c0_3] : memref<1x4x512xf32, #tpu.memory_space<vmem>>, vector<1x4x384xf32>
    %2 = vector.shape_cast %1 : vector<1x4x384xf32> to vector<4x384xf32>
    %c0_4 = arith.constant 0 : index
    %c0_5 = arith.constant 0 : index
    %3 = vector.load %arg5[%c0_4, %c0_5] : memref<36x384xf32, #tpu.memory_space<vmem>>, vector<4x384xf32>
    tpu.vector_store %arg5[%c0_4, %c0_5], %2 {strides = array<i32>} : memref<36x384xf32, #tpu.memory_space<vmem>>, vector<4x384xf32>,
    %c0_6 = arith.constant 0 : index
    %c0_7 = arith.constant 0 : index
    %c1 = arith.constant 1 : index
    %4 = vector.load %arg1[%c0_6, %c0_7, %c1] : memref<1x4x512xf32, #tpu.memory_space<vmem>>, vector<1x4x384xf32>
    %5 = vector.shape_cast %4 : vector<1x4x384xf32> to vector<4x384xf32>
    %c4 = arith.constant 4 : index
    %c0_8 = arith.constant 0 : index
    %6 = vector.load %arg5[%c4, %c0_8] : memref<36x384xf32, #tpu.memory_space<vmem>>, vector<4x384xf32>
    tpu.vector_store %arg5[%c4, %c0_8], %5 {strides = array<i32>} : memref<36x384xf32, #tpu.memory_space<vmem>>, vector<4x384xf32>,
    %c0_9 = arith.constant 0 : index
    %c0_10 = arith.constant 0 : index
    %c2 = arith.constant 2 : index
    %7 = vector.load %arg1[%c0_9, %c0_10, %c2] : memref<1x4x512xf32, #tpu.memory_space<vmem>>, vector<1x4x384xf32>
    %8 = vector.shape_cast %7 : vector<1x4x384xf32> to vector<4x384xf32>
    %c8 = arith.constant 8 : index
    %c0_11 = arith.constant 0 : index
    %9 = vector.load %arg5[%c8, %c0_11] : memref<36x384xf32, #tpu.memory_space<vmem>>, vector<4x384xf32>
    tpu.vector_store %arg5[%c8, %c0_11], %8 {strides = array<i32>} : memref<36x384xf32, #tpu.memory_space<vmem>>, vector<4x384xf32>,
    %c0_12 = arith.constant 0 : index
    %c0_13 = arith.constant 0 : index
    %c18 = arith.constant 18 : index
    %10 = vector.load %arg1[%c0_12, %c0_13, %c18] : memref<1x4x512xf32, #tpu.memory_space<vmem>>, vector<1x4x384xf32>
    %11 = vector.shape_cast %10 : vector<1x4x384xf32> to vector<4x384xf32>
    %c12 = arith.constant 12 : index
    %c0_14 = arith.constant 0 : index
    %12 = vector.load %arg5[%c12, %c0_14] : memref<36x384xf32, #tpu.memory_space<vmem>>, vector<4x384xf32>
    tpu.vector_store %arg5[%c12, %c0_14], %11 {strides = array<i32>} : memref<36x384xf32, #tpu.memory_space<vmem>>, vector<4x384xf32>,
    %c0_15 = arith.constant 0 : index
    %c0_16 = arith.constant 0 : index
    %c19 = arith.constant 19 : index
    %13 = vector.load %arg1[%c0_15, %c0_16, %c19] : memref<1x4x512xf32, #tpu.memory_space<vmem>>, vector<1x4x384xf32>
    %14 = vector.shape_cast %13 : vector<1x4x384xf32> to vector<4x384xf32>
    %c16 = arith.constant 16 : index
    %c0_17 = arith.constant 0 : index
    %15 = vector.load %arg5[%c16, %c0_17] : memref<36x384xf32, #tpu.memory_space<vmem>>, vector<4x384xf32>
    tpu.vector_store %arg5[%c16, %c0_17], %14 {strides = array<i32>} : memref<36x384xf32, #tpu.memory_space<vmem>>, vector<4x384xf32>,
    %c0_18 = arith.constant 0 : index
    %c0_19 = arith.constant 0 : index
    %c20 = arith.constant 20 : index
    %16 = vector.load %arg1[%c0_18, %c0_19, %c20] : memref<1x4x512xf32, #tpu.memory_space<vmem>>, vector<1x4x384xf32>
    %17 = vector.shape_cast %16 : vector<1x4x384xf32> to vector<4x384xf32>
    %c20_20 = arith.constant 20 : index
    %c0_21 = arith.constant 0 : index
    %18 = vector.load %arg5[%c20_20, %c0_21] : memref<36x384xf32, #tpu.memory_space<vmem>>, vector<4x384xf32>
    tpu.vector_store %arg5[%c20_20, %c0_21], %17 {strides = array<i32>} : memref<36x384xf32, #tpu.memory_space<vmem>>, vector<4x384xf32>,
    %c0_22 = arith.constant 0 : index
    %c0_23 = arith.constant 0 : index
    %c36 = arith.constant 36 : index
    %19 = vector.load %arg1[%c0_22, %c0_23, %c36] : memref<1x4x512xf32, #tpu.memory_space<vmem>>, vector<1x4x384xf32>
    %20 = vector.shape_cast %19 : vector<1x4x384xf32> to vector<4x384xf32>
    %c24 = arith.constant 24 : index
    %c0_24 = arith.constant 0 : index
    %21 = vector.load %arg5[%c24, %c0_24] : memref<36x384xf32, #tpu.memory_space<vmem>>, vector<4x384xf32>
    tpu.vector_store %arg5[%c24, %c0_24], %20 {strides = array<i32>} : memref<36x384xf32, #tpu.memory_space<vmem>>, vector<4x384xf32>,
    %c0_25 = arith.constant 0 : index
    %c0_26 = arith.constant 0 : index
    %c37 = arith.constant 37 : index
    %22 = vector.load %arg1[%c0_25, %c0_26, %c37] : memref<1x4x512xf32, #tpu.memory_space<vmem>>, vector<1x4x384xf32>
    %23 = vector.shape_cast %22 : vector<1x4x384xf32> to vector<4x384xf32>
    %c28 = arith.constant 28 : index
    %c0_27 = arith.constant 0 : index
    %24 = vector.load %arg5[%c28, %c0_27] : memref<36x384xf32, #tpu.memory_space<vmem>>, vector<4x384xf32>
    tpu.vector_store %arg5[%c28, %c0_27], %23 {strides = array<i32>} : memref<36x384xf32, #tpu.memory_space<vmem>>, vector<4x384xf32>,
    %c0_28 = arith.constant 0 : index
    %c0_29 = arith.constant 0 : index
    %c38 = arith.constant 38 : index
    %25 = vector.load %arg1[%c0_28, %c0_29, %c38] : memref<1x4x512xf32, #tpu.memory_space<vmem>>, vector<1x4x384xf32>
    %26 = vector.shape_cast %25 : vector<1x4x384xf32> to vector<4x384xf32>
    %c32 = arith.constant 32 : index
    %c0_30 = arith.constant 0 : index
    %27 = vector.load %arg5[%c32, %c0_30] : memref<36x384xf32, #tpu.memory_space<vmem>>, vector<4x384xf32>
    tpu.vector_store %arg5[%c32, %c0_30], %26 {strides = array<i32>} : memref<36x384xf32, #tpu.memory_space<vmem>>, vector<4x384xf32>,
    %c0_31 = arith.constant 0 : index
    %c0_32 = arith.constant 0 : index
    %28 = vector.load %arg2[%c0_31, %c0_32] : memref<32x36xf32, #tpu.memory_space<vmem>>, vector<32x36xf32>
    %c0_33 = arith.constant 0 : index
    %c0_34 = arith.constant 0 : index
    %29 = vector.load %arg5[%c0_33, %c0_34] : memref<36x384xf32, #tpu.memory_space<vmem>>, vector<36x384xf32>
    %cst = arith.constant dense<0.000000e+00> : vector<32x384xf32>
    %30 = tpu.matmul %28, %29, %cst {dimension_numbers = #tpu.dot_dimension_numbers<[1], [0], [0], [1], [0, 0, 1, 1], [], []>} : vector<32x36xf32>, vector<36x384xf32>, vector<32x384xf32> -> vector<32x384xf32>
    %31 = vector.broadcast %0 : vector<32x1xf32> to vector<32x384xf32>
    %32 = arith.addf %30, %31 : vector<32x384xf32>
    %c0_35 = arith.constant 0 : index
    %c0_36 = arith.constant 0 : index
    %c0_37 = arith.constant 0 : index
    %33 = vector.load %arg4[%c0_35, %c0_36, %c0_37] : memref<1x32x384xf32, #tpu.memory_space<vmem>>, vector<1x32x384xf32>
    %34 = vector.shape_cast %33 : vector<1x32x384xf32> to vector<32x384xf32>
    %35 = vector.shape_cast %32 : vector<32x384xf32> to vector<1x32x384xf32>
    tpu.vector_store %arg4[%c0_35, %c0_36, %c0_37], %35 {strides = array<i32>} : memref<1x32x384xf32, #tpu.memory_space<vmem>>, vector<1x32x384xf32>,
    return
  }
  func.func @transform_0(%arg0: i32) -> (i32, i32, i32) {
    %c0_i32 = arith.constant 0 : i32
    %c0_i32_0 = arith.constant 0 : i32
    %c0_i32_1 = arith.constant 0 : i32
    return %arg0, %c0_i32, %c0_i32_0 : i32, i32, i32
  }
  func.func @transform_1(%arg0: i32) -> (i32, i32) {
    %c0_i32 = arith.constant 0 : i32
    %c0_i32_0 = arith.constant 0 : i32
    %c0_i32_1 = arith.constant 0 : i32
    return %c0_i32, %c0_i32_0 : i32, i32
  }
  func.func @transform_2(%arg0: i32) -> (i32, i32) {
    %c0_i32 = arith.constant 0 : i32
    %c0_i32_0 = arith.constant 0 : i32
    %c0_i32_1 = arith.constant 0 : i32
    return %c0_i32, %c0_i32_0 : i32, i32
  }
  func.func @transform_3(%arg0: i32) -> (i32, i32, i32) {
    %c0_i32 = arith.constant 0 : i32
    %c0_i32_0 = arith.constant 0 : i32
    %c0_i32_1 = arith.constant 0 : i32
    return %arg0, %c0_i32, %c0_i32_0 : i32, i32, i32
  }
}

</mosaic_0001>

<llo_original>
// kernel: tpu_custom_call.1
$region0: #{tpu_custom_call.1}
  #allocation0 [shape = 'u32[]', space=smem, size = 0x4, offset = 0x4, fixed_abs, tag = 'smem constant byte address 0x4 - core index']
  #allocation1 [shape = 'u32[72,128]{1,0:T(1,128)}', space=vmem, size = 0x9000, scoped, tag = 'internal scratch']
  #allocation2 [shape = 'f32[36,384]{1,0:T(8,128)}', space=vmem, size = 0xf000, scoped, tag = 'scratch operand']
  %s0 = inlined_call_operand.vmem [shape: f32[2,4,512], index: 0, kind: input, shape index: {}]
  %s1 = inlined_call_operand.hbm [shape: f32[32,36], index: 1, kind: input, shape index: {}]
  %s2 = inlined_call_operand.vmem [shape: f32[32,1], index: 2, kind: input, shape index: {}]
  %s3 = inlined_call_operand.hbm [shape: f32[2,32,384], index: 3, kind: output, shape index: {}]
  %s4 = sld [smem:[#allocation0]]
  $region49: #{tpu_custom_call.1} parent=0
    _
  %s6 = ssub.s32 1, %s4
  %s7 = scalar_select 0, %s6, %s4
  $region1: #{tpu_custom_call.1} parent=0
    #allocation3 [shape = 'u8[16384]{0}', space=vmem, size = 0x4000, scoped, tag = 'input window, operand 1, single buffered']
    #allocation4 [shape = 's32[2]{0}', space=sflag, size = 0x8, scoped, tag = 'scoped memory for tpu_custom_call.1']
    #allocation5 [shape = 's32[2]{0}', space=sflag, size = 0x8, scoped, tag = 'scoped memory for tpu_custom_call.1']
    #allocation6 [shape = 'u8[98304]{0}', space=vmem, size = 0x18000, scoped, tag = 'output window, operand 0']
    %8 = vsyncpa [#allocation4], 0
    %9 = vsyncpa [#allocation5], 0
    %s10 = scalar_lea.sflag [#allocation5], 1
    %11 = vsyncpa %s10, 0
    loop: start=0, step=1, limit=4
    $region2: #{tpu_custom_call.1} parent=1 // loop_pre_header
      _
    $region3: #{tpu_custom_call.1} parent=1 // loop_header
      %s13 = sphi 0, %s17
      %p14 = scmp.ge.s32.totalorder %s13, 4
      %s23 = sphi 0, %s25
      %s26 = sphi 0, %s23
      %s27 = sphi 0, %s26
      %s43 = sphi 0, %s27
      %s47 = sphi 0, %s47
      %s49 = sphi 0, %s47
      %s50 = sphi 0, %s49
      %s64 = sphi 0, %s50
      %s68 = sphi 0, %s68
      %s70 = sphi 0, %s68
      %s71 = sphi 0, %s70
      %s85 = sphi 0, %s71
      %s91 = sphi 0, %s93
      %s94 = sphi 0, %s91
      %s95 = sphi 0, %s94
      %s111 = sphi 0, %s95
    $region4: #{tpu_custom_call.1} parent=1 // loop_header_branch
      %16 = sbr.rel (%p14) target = $region8
    $region5: #{tpu_custom_call.1} parent=1 // loop_body
      %s18 = ssub.s32 %s13, 1
      %s19 = ssub.s32 %s13, 2
      %s20 = sadd.s32 %s13, 1
      %s21 = ssub.s32 %s13, %s20
      %p22 = scmp.eq.s32.totalorder %s21, 0
      %s24 = sadd.s32 %s23, 1
      %s25 = scalar_select %p22, %s23, %s24
      %p28 = pneg %p22
      %p29 = scmp.eq.s32.totalorder %s13, 1
      %p30 = por %p28, %p29
      %p31 = scmp.ne.s32.totalorder %s23, %s26
      %p32 = scmp.eq.s32.totalorder %s13, 0
      %p33 = por %p31, %p32
      %p34 = scmp.ne.s32.totalorder %s23, %s26
      %p35 = scmp.eq.s32.totalorder %s18, 1
      %p36 = por %p34, %p35
      %p37 = scmp.ne.s32.totalorder %s26, %s27
      %p38 = scmp.eq.s32.totalorder %s18, 0
      %p39 = por %p37, %p38
      %p40 = scmp.ne.s32.totalorder %s26, %s27
      %p41 = scmp.eq.s32.totalorder %s19, 1
      %p42 = por %p40, %p41
      %p44 = scmp.ne.s32.totalorder %s27, %s43
      %p45 = scmp.eq.s32.totalorder %s19, 0
      %p46 = por %p44, %p45
      %s48 = sadd.s32 %s47, 1
      %p51 = scmp.eq.s32.totalorder %s13, 1
      %p52 = scmp.ne.s32.totalorder %s47, %s49
      %p53 = scmp.eq.s32.totalorder %s13, 0
      %p54 = por %p52, %p53
      %p55 = scmp.ne.s32.totalorder %s47, %s49
      %p56 = scmp.eq.s32.totalorder %s18, 1
      %p57 = por %p55, %p56
      %p58 = scmp.ne.s32.totalorder %s49, %s50
      %p59 = scmp.eq.s32.totalorder %s18, 0
      %p60 = por %p58, %p59
      %p61 = scmp.ne.s32.totalorder %s49, %s50
      %p62 = scmp.eq.s32.totalorder %s19, 1
      %p63 = por %p61, %p62
      %p65 = scmp.ne.s32.totalorder %s50, %s64
      %p66 = scmp.eq.s32.totalorder %s19, 0
      %p67 = por %p65, %p66
      %s69 = sadd.s32 %s68, 1
      %p72 = scmp.eq.s32.totalorder %s13, 1
      %p73 = scmp.ne.s32.totalorder %s68, %s70
      %p74 = scmp.eq.s32.totalorder %s13, 0
      %p75 = por %p73, %p74
      %p76 = scmp.ne.s32.totalorder %s68, %s70
      %p77 = scmp.eq.s32.totalorder %s18, 1
      %p78 = por %p76, %p77
      %p79 = scmp.ne.s32.totalorder %s70, %s71
      %p80 = scmp.eq.s32.totalorder %s18, 0
      %p81 = por %p79, %p80
      %p82 = scmp.ne.s32.totalorder %s70, %s71
      %p83 = scmp.eq.s32.totalorder %s19, 1
      %p84 = por %p82, %p83
      %p86 = scmp.ne.s32.totalorder %s71, %s85
      %p87 = scmp.eq.s32.totalorder %s19, 0
      %p88 = por %p86, %p87
      %s89 = ssub.s32 %s13, %s20
      %p90 = scmp.eq.s32.totalorder %s89, 0
      %s92 = sadd.s32 %s91, 1
      %s93 = scalar_select %p90, %s91, %s92
      %p96 = pneg %p90
      %p97 = scmp.eq.s32.totalorder %s13, 1
      %p98 = por %p96, %p97
      %p99 = scmp.ne.s32.totalorder %s91, %s94
      %p100 = scmp.eq.s32.totalorder %s13, 0
      %p101 = por %p99, %p100
      %p102 = scmp.ne.s32.totalorder %s91, %s94
      %p103 = scmp.eq.s32.totalorder %s18, 1
      %p104 = por %p102, %p103
      %p105 = scmp.ne.s32.totalorder %s94, %s95
      %p106 = scmp.eq.s32.totalorder %s18, 0
      %p107 = por %p105, %p106
      %p108 = scmp.ne.s32.totalorder %s94, %s95
      %p109 = scmp.eq.s32.totalorder %s19, 1
      %p110 = por %p108, %p109
      %p112 = scmp.ne.s32.totalorder %s95, %s111
      %p113 = scmp.eq.s32.totalorder %s19, 0
      %p114 = por %p112, %p113
      %p115 = scmp.le.s32.totalorder 1, %s13
      %p116 = scmp.lt.s32.totalorder %s13, 3
      %p117 = pnand %p115, %p116
      %p118 = pneg %p117
      // Predicated region
      $region9: #{tpu_custom_call.1} parent=5 // pred_check
        _
      $region10: #{tpu_custom_call.1} parent=5 // pred_check_branch
        %120 = sbr.rel (%p117) target = $region12
      $region11: #{tpu_custom_call.1} parent=5 // pred_region
        %s121 = ssub.s32 %s13, 1
        // Predicated region
        $region13: #{tpu_custom_call.1} parent=11 // pred_check
          %p122 = pneg %p60
        $region14: #{tpu_custom_call.1} parent=11 // pred_check_branch
          %124 = sbr.rel (%p122) target = $region16
        $region15: #{tpu_custom_call.1} parent=11 // pred_region
          %126 = vsyncadd [#allocation4], 0
          %s127 = sshll.u32 %s1, 4
          %s128 = int_to_ptr.hbm [resolvable:$true] %s127
          %s129 = sshll.u32 [#allocation3], 4
          %s130 = int_to_ptr.vmem [resolvable:$true] %s129
          %135 = dma.hbm_to_vmem [thread:$0]  %s128, 512, %s130, [#allocation4], 128, 128, 8
        $region16: #{tpu_custom_call.1} parent=11 // pred_fallthru
          _
        // Predicated region
        $region17: #{tpu_custom_call.1} parent=11 // pred_check
          %p136 = pneg %p81
        $region18: #{tpu_custom_call.1} parent=11 // pred_check_branch
          %138 = sbr.rel (%p136) target = $region20
        $region19: #{tpu_custom_call.1} parent=11 // pred_region
          _
        $region20: #{tpu_custom_call.1} parent=11 // pred_fallthru
          _
      $region12: #{tpu_custom_call.1} parent=5 // pred_fallthru
        _
      %p139 = scmp.lt.s32.totalorder %s13, 2
      // Predicated region
      $region21: #{tpu_custom_call.1} parent=5 // pred_check
        %p140 = pneg %p139
      $region22: #{tpu_custom_call.1} parent=5 // pred_check_branch
        %142 = sbr.rel (%p140) target = $region24
      $region23: #{tpu_custom_call.1} parent=5 // pred_region
        // Predicated region
        $region25: #{tpu_custom_call.1} parent=23 // pred_check
          %p143 = pneg %p33
        $region26: #{tpu_custom_call.1} parent=23 // pred_check_branch
          %145 = sbr.rel (%p143) target = $region28
        $region27: #{tpu_custom_call.1} parent=23 // pred_region
          %p146 = scmp.lt.s32.totalorder %s13, 1
          %s147 = scalar_select %p146, %s13, 1
          %s148 = smul.addr %s147, 4
          %s149 = smul.addr %s148, 4
          %s150 = scalar_lea.vmem %s0, %s149
        $region28: #{tpu_custom_call.1} parent=23 // pred_fallthru
          _
      $region24: #{tpu_custom_call.1} parent=5 // pred_fallthru
        _
      %p151 = scmp.le.s32.totalorder 1, %s13
      %p152 = scmp.lt.s32.totalorder %s13, 3
      %p153 = pnand %p151, %p152
      %p154 = pneg %p153
      // Predicated region
      $region29: #{tpu_custom_call.1} parent=5 // pred_check
        _
      $region30: #{tpu_custom_call.1} parent=5 // pred_check_branch
        %156 = sbr.rel (%p153) target = $region32
      $region31: #{tpu_custom_call.1} parent=5 // pred_region
        %s157 = ssub.s32 %s13, 1
        // Predicated region
        $region33: #{tpu_custom_call.1} parent=31 // pred_check
          %p158 = pneg %p60
        $region34: #{tpu_custom_call.1} parent=31 // pred_check_branch
          %160 = sbr.rel (%p158) target = $region36
        $region35: #{tpu_custom_call.1} parent=31 // pred_region
          %162 = dma.done [#allocation4], 512
        $region36: #{tpu_custom_call.1} parent=31 // pred_fallthru
          _
        %p163 = scmp.lt.s32.totalorder %s18, 1
        %s164 = scalar_select %p163, %s18, 1
        %s165 = smul.addr %s164, 4
        %s166 = smul.addr %s165, 4
        %s167 = scalar_lea.vmem %s0, %s166
        %p168 = pneg %p39
        %p169 = pneg %p36
        %p170 = pneg %p60
        %p171 = pneg %p57
        %p172 = pneg %p81
        %p173 = pneg %p78
        %p174 = pneg %p107
        %p175 = pneg %p104
        %s176 = sand.u32 %s94, 1
        %s177 = scalar_lea.sflag [#allocation5], %s176
        %s178 = sand.u32 %s94, 1
        %s179 = smul.addr %s178, 96
        %s180 = scalar_lea.vmem [#allocation6], %s179
        %p181 = scmp.lt.s32.totalorder %s18, 1
        %s182 = scalar_select %p181, %s18, 1
        %s183 = smul.addr %s182, 4
        %s184 = smul.addr %s183, 4
        %s185 = scalar_lea.vmem %s0, %s184
        %v186 = vld [vmem:[%s2] sm:$0xff]
        %v187 = vld [vmem:[%s2 + $0x8] sm:$0xff]
        %v188 = vld [vmem:[%s2 + $0x10] sm:$0xff]
        %v189 = vld [vmem:[%s2 + $0x18] sm:$0xff]
        %v190 = vld [vmem:[%s185] sm:$0xff]
        %v191 = vld [vmem:[%s185 + $0x8] sm:$0xf]
        %194 = vst [vmem:[#allocation1] ss:$2 sm:$0xff] %v190
        %s195 = scalar_lea.vmem [#allocation1], 16
        %196 = vst [vmem:[%s195] ss:$2 sm:$0xff] %v191
        %v197 = vld.sshfl [vmem:[#allocation1] sm:$0xff pattern:$0x75316420]
        %v198 = vld.sshfl [vmem:[#allocation1 + $0x8] sm:$0xff pattern:$0x75316420]
        %v199 = vld.sshfl [vmem:[#allocation1 + $0x10] sm:$0xff pattern:$0x75316420]
        %203 = vst [vmem:[#allocation2] sm:$0xf] %v197
        %204 = vst [vmem:[#allocation2 + $0x8] sm:$0xf] %v198
        %205 = vst [vmem:[#allocation2 + $0x10] sm:$0xf] %v199
        %v206 = vld [vmem:[%s185] sm:$0xff]
        %v207 = vld [vmem:[%s185 + $0x8] sm:$0xff]
        %s210 = scalar_lea.vmem [#allocation1], 1
        %211 = vst [vmem:[%s210] ss:$2 sm:$0xff] %v206
        %s212 = scalar_lea.vmem [#allocation1], 17
        %213 = vst [vmem:[%s212] ss:$2 sm:$0xff] %v207
        %v214 = vld.sshfl [vmem:[#allocation1] sm:$0xff pattern:$0x75316420]
        %v215 = vld.sshfl [vmem:[#allocation1 + $0x8] sm:$0xff pattern:$0x75316420]
        %v216 = vld.sshfl [vmem:[#allocation1 + $0x10] sm:$0xff pattern:$0x75316420]
        %v217 = vld.sshfl [vmem:[#allocation1 + $0x18] sm:$0xff pattern:$0x75316420]
        %218 = vrot.lane.b32.xlu0 %v214, 127
        %v219 = vpop.permute.xlu0 %218
        %220 = vrot.lane.b32.xlu0 %v215, 127
        %v221 = vpop.permute.xlu0 %220
        %222 = vrot.lane.b32.xlu0 %v216, 127
        %v223 = vpop.permute.xlu0 %222
        %224 = vrot.lane.b32.xlu0 %v217, 127
        %v225 = vpop.permute.xlu0 %224
        %vm226 = vcmask 1039360
        %v227 = vsel %vm226, %v219, %v221
        %v228 = vsel %vm226, %v221, %v223
        %v229 = vsel %vm226, %v223, %v225
        %233 = vst [vmem:[#allocation2] sm:$0xf0] %v227
        %234 = vst [vmem:[#allocation2 + $0x8] sm:$0xf0] %v228
        %235 = vst [vmem:[#allocation2 + $0x10] sm:$0xf0] %v229
        %v236 = vld [vmem:[%s185] sm:$0xff]
        %v237 = vld [vmem:[%s185 + $0x8] sm:$0xff]
        %240 = vst [vmem:[#allocation1] ss:$2 sm:$0xff] %v236
        %s241 = scalar_lea.vmem [#allocation1], 16
        %242 = vst [vmem:[%s241] ss:$2 sm:$0xff] %v237
        %v243 = vld.sshfl [vmem:[#allocation1] sm:$0xff pattern:$0x75316420]
        %v244 = vld.sshfl [vmem:[#allocation1 + $0x8] sm:$0xff pattern:$0x75316420]
        %v245 = vld.sshfl [vmem:[#allocation1 + $0x10] sm:$0xff pattern:$0x75316420]
        %v246 = vld.sshfl [vmem:[#allocation1 + $0x18] sm:$0xff pattern:$0x75316420]
        %247 = vrot.lane.b32.xlu0 %v243, 126
        %v248 = vpop.permute.xlu0 %247
        %249 = vrot.lane.b32.xlu0 %v244, 126
        %v250 = vpop.permute.xlu0 %249
        %251 = vrot.lane.b32.xlu0 %v245, 126
        %v252 = vpop.permute.xlu0 %251
        %253 = vrot.lane.b32.xlu0 %v246, 126
        %v254 = vpop.permute.xlu0 %253
        %vm255 = vcmask 1031168
        %v256 = vsel %vm255, %v248, %v250
        %v257 = vsel %vm255, %v250, %v252
        %v258 = vsel %vm255, %v252, %v254
        %262 = vst [vmem:[#allocation2 + $0x18] sm:$0xf] %v256
        %263 = vst [vmem:[#allocation2 + $0x20] sm:$0xf] %v257
        %264 = vst [vmem:[#allocation2 + $0x28] sm:$0xf] %v258
        %v265 = vld [vmem:[%s185] sm:$0xff]
        %v266 = vld [vmem:[%s185 + $0x8] sm:$0xff]
        %s269 = scalar_lea.vmem [#allocation1], 1
        %270 = vst [vmem:[%s269] ss:$2 sm:$0xff] %v265
        %s271 = scalar_lea.vmem [#allocation1], 17
        %272 = vst [vmem:[%s271] ss:$2 sm:$0xff] %v266
        %v273 = vld.sshfl [vmem:[#allocation1] sm:$0xff pattern:$0x75316420]
        %v274 = vld.sshfl [vmem:[#allocation1 + $0x8] sm:$0xff pattern:$0x75316420]
        %v275 = vld.sshfl [vmem:[#allocation1 + $0x10] sm:$0xff pattern:$0x75316420]
        %v276 = vld.sshfl [vmem:[#allocation1 + $0x18] sm:$0xff pattern:$0x75316420]
        %277 = vrot.lane.b32.xlu0 %v273, 110
        %v278 = vpop.permute.xlu0 %277
        %279 = vrot.lane.b32.xlu0 %v274, 110
        %v280 = vpop.permute.xlu0 %279
        %281 = vrot.lane.b32.xlu0 %v275, 110
        %v282 = vpop.permute.xlu0 %281
        %283 = vrot.lane.b32.xlu0 %v276, 110
        %v284 = vpop.permute.xlu0 %283
        %vm285 = vcmask 900096
        %v286 = vsel %vm285, %v278, %v280
        %v287 = vsel %vm285, %v280, %v282
        %v288 = vsel %vm285, %v282, %v284
        %292 = vst [vmem:[#allocation2 + $0x18] sm:$0xf0] %v286
        %293 = vst [vmem:[#allocation2 + $0x20] sm:$0xf0] %v287
        %294 = vst [vmem:[#allocation2 + $0x28] sm:$0xf0] %v288
        %v295 = vld [vmem:[%s185] sm:$0xff]
        %v296 = vld [vmem:[%s185 + $0x8] sm:$0xff]
        %299 = vst [vmem:[#allocation1] ss:$2 sm:$0xff] %v295
        %s300 = scalar_lea.vmem [#allocation1], 16
        %301 = vst [vmem:[%s300] ss:$2 sm:$0xff] %v296
        %v302 = vld.sshfl [vmem:[#allocation1] sm:$0xff pattern:$0x75316420]
        %v303 = vld.sshfl [vmem:[#allocation1 + $0x8] sm:$0xff pattern:$0x75316420]
        %v304 = vld.sshfl [vmem:[#allocation1 + $0x10] sm:$0xff pattern:$0x75316420]
        %v305 = vld.sshfl [vmem:[#allocation1 + $0x18] sm:$0xff pattern:$0x75316420]
        %306 = vrot.lane.b32.xlu0 %v302, 109
        %v307 = vpop.permute.xlu0 %306
        %308 = vrot.lane.b32.xlu0 %v303, 109
        %v309 = vpop.permute.xlu0 %308
        %310 = vrot.lane.b32.xlu0 %v304, 109
        %v311 = vpop.permute.xlu0 %310
        %312 = vrot.lane.b32.xlu0 %v305, 109
        %v313 = vpop.permute.xlu0 %312
        %vm314 = vcmask 891904
        %v315 = vsel %vm314, %v307, %v309
        %v316 = vsel %vm314, %v309, %v311
        %v317 = vsel %vm314, %v311, %v313
        %321 = vst [vmem:[#allocation2 + $0x30] sm:$0xf] %v315
        %322 = vst [vmem:[#allocation2 + $0x38] sm:$0xf] %v316
        %323 = vst [vmem:[#allocation2 + $0x40] sm:$0xf] %v317
        %v324 = vld [vmem:[%s185] sm:$0xff]
        %v325 = vld [vmem:[%s185 + $0x8] sm:$0xff]
        %s328 = scalar_lea.vmem [#allocation1], 1
        %329 = vst [vmem:[%s328] ss:$2 sm:$0xff] %v324
        %s330 = scalar_lea.vmem [#allocation1], 17
        %331 = vst [vmem:[%s330] ss:$2 sm:$0xff] %v325
        %v332 = vld.sshfl [vmem:[#allocation1] sm:$0xff pattern:$0x75316420]
        %v333 = vld.sshfl [vmem:[#allocation1 + $0x8] sm:$0xff pattern:$0x75316420]
        %v334 = vld.sshfl [vmem:[#allocation1 + $0x10] sm:$0xff pattern:$0x75316420]
        %v335 = vld.sshfl [vmem:[#allocation1 + $0x18] sm:$0xff pattern:$0x75316420]
        %336 = vrot.lane.b32.xlu0 %v332, 108
        %v337 = vpop.permute.xlu0 %336
        %338 = vrot.lane.b32.xlu0 %v333, 108
        %v339 = vpop.permute.xlu0 %338
        %340 = vrot.lane.b32.xlu0 %v334, 108
        %v341 = vpop.permute.xlu0 %340
        %342 = vrot.lane.b32.xlu0 %v335, 108
        %v343 = vpop.permute.xlu0 %342
        %vm344 = vcmask 883712
        %v345 = vsel %vm344, %v337, %v339
        %v346 = vsel %vm344, %v339, %v341
        %v347 = vsel %vm344, %v341, %v343
        %351 = vst [vmem:[#allocation2 + $0x30] sm:$0xf0] %v345
        %352 = vst [vmem:[#allocation2 + $0x38] sm:$0xf0] %v346
        %353 = vst [vmem:[#allocation2 + $0x40] sm:$0xf0] %v347
        %v354 = vld [vmem:[%s185] sm:$0xff]
        %v355 = vld [vmem:[%s185 + $0x8] sm:$0xff]
        %358 = vst [vmem:[#allocation1] ss:$2 sm:$0xff] %v354
        %s359 = scalar_lea.vmem [#allocation1], 16
        %360 = vst [vmem:[%s359] ss:$2 sm:$0xff] %v355
        %v361 = vld.sshfl [vmem:[#allocation1] sm:$0xff pattern:$0x75316420]
        %v362 = vld.sshfl [vmem:[#allocation1 + $0x8] sm:$0xff pattern:$0x75316420]
        %v363 = vld.sshfl [vmem:[#allocation1 + $0x10] sm:$0xff pattern:$0x75316420]
        %v364 = vld.sshfl [vmem:[#allocation1 + $0x18] sm:$0xff pattern:$0x75316420]
        %365 = vrot.lane.b32.xlu0 %v361, 92
        %v366 = vpop.permute.xlu0 %365
        %367 = vrot.lane.b32.xlu0 %v362, 92
        %v368 = vpop.permute.xlu0 %367
        %369 = vrot.lane.b32.xlu0 %v363, 92
        %v370 = vpop.permute.xlu0 %369
        %371 = vrot.lane.b32.xlu0 %v364, 92
        %v372 = vpop.permute.xlu0 %371
        %vm373 = vcmask 752640
        %v374 = vsel %vm373, %v366, %v368
        %v375 = vsel %vm373, %v368, %v370
        %v376 = vsel %vm373, %v370, %v372
        %380 = vst [vmem:[#allocation2 + $0x48] sm:$0xf] %v374
        %381 = vst [vmem:[#allocation2 + $0x50] sm:$0xf] %v375
        %382 = vst [vmem:[#allocation2 + $0x58] sm:$0xf] %v376
        %v383 = vld [vmem:[%s185] sm:$0xff]
        %v384 = vld [vmem:[%s185 + $0x8] sm:$0xff]
        %s387 = scalar_lea.vmem [#allocation1], 1
        %388 = vst [vmem:[%s387] ss:$2 sm:$0xff] %v383
        %s389 = scalar_lea.vmem [#allocation1], 17
        %390 = vst [vmem:[%s389] ss:$2 sm:$0xff] %v384
        %v391 = vld.sshfl [vmem:[#allocation1] sm:$0xff pattern:$0x75316420]
        %v392 = vld.sshfl [vmem:[#allocation1 + $0x8] sm:$0xff pattern:$0x75316420]
        %v393 = vld.sshfl [vmem:[#allocation1 + $0x10] sm:$0xff pattern:$0x75316420]
        %v394 = vld.sshfl [vmem:[#allocation1 + $0x18] sm:$0xff pattern:$0x75316420]
        %395 = vrot.lane.b32.xlu0 %v391, 91
        %v396 = vpop.permute.xlu0 %395
        %397 = vrot.lane.b32.xlu0 %v392, 91
        %v398 = vpop.permute.xlu0 %397
        %399 = vrot.lane.b32.xlu0 %v393, 91
        %v400 = vpop.permute.xlu0 %399
        %401 = vrot.lane.b32.xlu0 %v394, 91
        %v402 = vpop.permute.xlu0 %401
        %vm403 = vcmask 744448
        %v404 = vsel %vm403, %v396, %v398
        %v405 = vsel %vm403, %v398, %v400
        %v406 = vsel %vm403, %v400, %v402
        %410 = vst [vmem:[#allocation2 + $0x48] sm:$0xf0] %v404
        %411 = vst [vmem:[#allocation2 + $0x50] sm:$0xf0] %v405
        %412 = vst [vmem:[#allocation2 + $0x58] sm:$0xf0] %v406
        %v413 = vld [vmem:[%s185] sm:$0xff]
        %v414 = vld [vmem:[%s185 + $0x8] sm:$0xff]
        %417 = vst [vmem:[#allocation1] ss:$2 sm:$0xff] %v413
        %s418 = scalar_lea.vmem [#allocation1], 16
        %419 = vst [vmem:[%s418] ss:$2 sm:$0xff] %v414
        %v420 = vld.sshfl [vmem:[#allocation1] sm:$0xff pattern:$0x75316420]
        %v421 = vld.sshfl [vmem:[#allocation1 + $0x8] sm:$0xff pattern:$0x75316420]
        %v422 = vld.sshfl [vmem:[#allocation1 + $0x10] sm:$0xff pattern:$0x75316420]
        %v423 = vld.sshfl [vmem:[#allocation1 + $0x18] sm:$0xff pattern:$0x75316420]
        %424 = vrot.lane.b32.xlu0 %v420, 90
        %v425 = vpop.permute.xlu0 %424
        %426 = vrot.lane.b32.xlu0 %v421, 90
        %v427 = vpop.permute.xlu0 %426
        %428 = vrot.lane.b32.xlu0 %v422, 90
        %v429 = vpop.permute.xlu0 %428
        %430 = vrot.lane.b32.xlu0 %v423, 90
        %v431 = vpop.permute.xlu0 %430
        %vm432 = vcmask 736256
        %v433 = vsel %vm432, %v425, %v427
        %v434 = vsel %vm432, %v427, %v429
        %v435 = vsel %vm432, %v429, %v431
        %439 = vst [vmem:[#allocation2 + $0x60] sm:$0xf] %v433
        %440 = vst [vmem:[#allocation2 + $0x68] sm:$0xf] %v434
        %441 = vst [vmem:[#allocation2 + $0x70] sm:$0xf] %v435
        %v442 = vld [vmem:[#allocation3] sm:$0xff]
        %v443 = vld [vmem:[#allocation3 + $0x8] sm:$0xff]
        %v444 = vld [vmem:[#allocation3 + $0x10] sm:$0xff]
        %v445 = vld [vmem:[#allocation3 + $0x18] sm:$0xff]
        %v446 = vld [vmem:[#allocation2] sm:$0xff]
        %v447 = vld [vmem:[#allocation2 + $0x8] sm:$0xff]
        %v448 = vld [vmem:[#allocation2 + $0x10] sm:$0xff]
        %v449 = vld [vmem:[#allocation2 + $0x18] sm:$0xff]
        %v450 = vld [vmem:[#allocation2 + $0x20] sm:$0xff]
        %v451 = vld [vmem:[#allocation2 + $0x28] sm:$0xff]
        %v452 = vld [vmem:[#allocation2 + $0x30] sm:$0xff]
        %v453 = vld [vmem:[#allocation2 + $0x38] sm:$0xff]
        %v454 = vld [vmem:[#allocation2 + $0x40] sm:$0xff]
        %v455 = vld [vmem:[#allocation2 + $0x48] sm:$0xff]
        %v456 = vld [vmem:[#allocation2 + $0x50] sm:$0xff]
        %v457 = vld [vmem:[#allocation2 + $0x58] sm:$0xff]
        %v458 = vld [vmem:[#allocation2 + $0x60] sm:$0xf]
        %v459 = vld [vmem:[#allocation2 + $0x68] sm:$0xf]
        %v460 = vld [vmem:[#allocation2 + $0x70] sm:$0xf]
        %462 = vset.pattern.permute.xlu0 0
        %463 = vperm.xlu0 %462, %v186
        %v464 = vpop.permute.xlu0 %463
        %467 = vset.pattern.permute.xlu0 0
        %468 = vperm.xlu0 %467, %v187
        %v469 = vpop.permute.xlu0 %468
        %472 = vset.pattern.permute.xlu0 0
        %473 = vperm.xlu0 %472, %v188
        %v474 = vpop.permute.xlu0 %473
        %477 = vset.pattern.permute.xlu0 0
        %478 = vperm.xlu0 %477, %v189
        %v479 = vpop.permute.xlu0 %478
        %vm481 = vcmask 293888
        %v483 = vsel %vm481, %v442, 0
        %v486 = vsel %vm481, %v443, 0
        %v489 = vsel %vm481, %v444, 0
        %v492 = vsel %vm481, %v445, 0
        %vm494 = vcmask 1043456
        %v496 = vsel %vm494, %v458, 0
        %v499 = vsel %vm494, %v459, 0
        %v502 = vsel %vm494, %v460, 0
        %504 = vmatpush.msra.mxu0 0.0
        %505 = vmatpush.msra.mxu0 0.0
        %506 = vmatpush.msra.mxu0 0.0
        %507 = vmatpush.msra.mxu0 0.0
        %508 = vmatpush.msra.mxu0 0.0
        %509 = vmatpush.msra.mxu0 0.0
        %510 = vmatpush.msra.mxu0 0.0
        %511 = vmatpush.msra.mxu0 0.0
        %512 = vmatpush.msra.mxu0 0.0
        %513 = vmatpush.msra.mxu0 0.0
        %514 = vmatpush.msra.mxu0 0.0
        %515 = vmatpush.msra.mxu0 %v496
        %516 = vmatpush.msra.mxu0 %v455
        %517 = vmatpush.msra.mxu0 %v452
        %518 = vmatpush.msra.mxu0 %v449
        %519 = vmatpush.msra.mxu0 %v446
        %520 = vmatmul.f32.gmra.mxu0 %v483
        %v521 = vpop.f32.mrf.mxu0
        %v522 = vadd.f32 %v464, %v521
        %523 = vmatmul.f32.gmra.mxu0 %v486
        %v524 = vpop.f32.mrf.mxu0
        %v525 = vadd.f32 %v469, %v524
        %526 = vmatmul.f32.gmra.mxu0 %v489
        %v527 = vpop.f32.mrf.mxu0
        %v528 = vadd.f32 %v474, %v527
        %529 = vmatmul.f32.gmra.mxu0 %v492
        %v530 = vpop.f32.mrf.mxu0
        %v531 = vadd.f32 %v479, %v530
        %532 = vdwg.mxu0
        %533 = vmatpush.msra.mxu0 0.0
        %534 = vmatpush.msra.mxu0 0.0
        %535 = vmatpush.msra.mxu0 0.0
        %536 = vmatpush.msra.mxu0 0.0
        %537 = vmatpush.msra.mxu0 0.0
        %538 = vmatpush.msra.mxu0 0.0
        %539 = vmatpush.msra.mxu0 0.0
        %540 = vmatpush.msra.mxu0 0.0
        %541 = vmatpush.msra.mxu0 0.0
        %542 = vmatpush.msra.mxu0 0.0
        %543 = vmatpush.msra.mxu0 0.0
        %544 = vmatpush.msra.mxu0 %v499
        %545 = vmatpush.msra.mxu0 %v456
        %546 = vmatpush.msra.mxu0 %v453
        %547 = vmatpush.msra.mxu0 %v450
        %548 = vmatpush.msra.mxu0 %v447
        %549 = vmatmul.f32.gmra.mxu0 %v483
        %v550 = vpop.f32.mrf.mxu0
        %v551 = vadd.f32 %v464, %v550
        %552 = vmatmul.f32.gmra.mxu0 %v486
        %v553 = vpop.f32.mrf.mxu0
        %v554 = vadd.f32 %v469, %v553
        %555 = vmatmul.f32.gmra.mxu0 %v489
        %v556 = vpop.f32.mrf.mxu0
        %v557 = vadd.f32 %v474, %v556
        %558 = vmatmul.f32.gmra.mxu0 %v492
        %v559 = vpop.f32.mrf.mxu0
        %v560 = vadd.f32 %v479, %v559
        %561 = vdwg.mxu0
        %562 = vmatpush.msra.mxu0 0.0
        %563 = vmatpush.msra.mxu0 0.0
        %564 = vmatpush.msra.mxu0 0.0
        %565 = vmatpush.msra.mxu0 0.0
        %566 = vmatpush.msra.mxu0 0.0
        %567 = vmatpush.msra.mxu0 0.0
        %568 = vmatpush.msra.mxu0 0.0
        %569 = vmatpush.msra.mxu0 0.0
        %570 = vmatpush.msra.mxu0 0.0
        %571 = vmatpush.msra.mxu0 0.0
        %572 = vmatpush.msra.mxu0 0.0
        %573 = vmatpush.msra.mxu0 %v502
        %574 = vmatpush.msra.mxu0 %v457
        %575 = vmatpush.msra.mxu0 %v454
        %576 = vmatpush.msra.mxu0 %v451
        %577 = vmatpush.msra.mxu0 %v448
        %578 = vmatmul.f32.gmra.mxu0 %v483
        %v579 = vpop.f32.mrf.mxu0
        %v580 = vadd.f32 %v464, %v579
        %581 = vmatmul.f32.gmra.mxu0 %v486
        %v582 = vpop.f32.mrf.mxu0
        %v583 = vadd.f32 %v469, %v582
        %584 = vmatmul.f32.gmra.mxu0 %v489
        %v585 = vpop.f32.mrf.mxu0
        %v586 = vadd.f32 %v474, %v585
        %587 = vmatmul.f32.gmra.mxu0 %v492
        %v588 = vpop.f32.mrf.mxu0
        %v589 = vadd.f32 %v479, %v588
        %590 = vdwg.mxu0
        %591 = vst [vmem:[%s180] sm:$0xff] %v522
        %592 = vst [vmem:[%s180 + $0x8] sm:$0xff] %v551
        %593 = vst [vmem:[%s180 + $0x10] sm:$0xff] %v580
        %594 = vst [vmem:[%s180 + $0x18] sm:$0xff] %v525
        %595 = vst [vmem:[%s180 + $0x20] sm:$0xff] %v554
        %596 = vst [vmem:[%s180 + $0x28] sm:$0xff] %v583
        %597 = vst [vmem:[%s180 + $0x30] sm:$0xff] %v528
        %598 = vst [vmem:[%s180 + $0x38] sm:$0xff] %v557
        %599 = vst [vmem:[%s180 + $0x40] sm:$0xff] %v586
        %600 = vst [vmem:[%s180 + $0x48] sm:$0xff] %v531
        %601 = vst [vmem:[%s180 + $0x50] sm:$0xff] %v560
        %602 = vst [vmem:[%s180 + $0x58] sm:$0xff] %v589
        %s603 = sand.u32 %s94, 1
        %s604 = scalar_lea.sflag [#allocation5], %s603
        %s605 = sand.u32 %s94, 1
        %s606 = smul.addr %s605, 96
        %s607 = scalar_lea.vmem [#allocation6], %s606
        // Predicated region
        $region37: #{tpu_custom_call.1} parent=31 // pred_check
          %p608 = pneg %p104
        $region38: #{tpu_custom_call.1} parent=31 // pred_check_branch
          %610 = sbr.rel (%p608) target = $region40
        $region39: #{tpu_custom_call.1} parent=31 // pred_region
          %612 = vsyncadd %s604, 0
          %s613 = smul.addr %s18, 12
          %s614 = smul.addr %s613, 8
          %s615 = scalar_lea.hbm %s3, %s614
          %s616 = sshll.u32 %s607, 4
          %s617 = int_to_ptr.vmem [resolvable:$true] %s616
          %s618 = sshll.u32 %s615, 4
          %s619 = int_to_ptr.hbm [resolvable:$true] %s618
          %624 = dma.vmem_to_hbm [thread:$0]  %s617, 1536, %s619, %s604, 384, 384, 24
        $region40: #{tpu_custom_call.1} parent=31 // pred_fallthru
          _
      $region32: #{tpu_custom_call.1} parent=5 // pred_fallthru
        _
      %p625 = scmp.le.s32.totalorder 2, %s13
      // Predicated region
      $region41: #{tpu_custom_call.1} parent=5 // pred_check
        %p626 = pneg %p625
      $region42: #{tpu_custom_call.1} parent=5 // pred_check_branch
        %628 = sbr.rel (%p626) target = $region44
      $region43: #{tpu_custom_call.1} parent=5 // pred_region
        %s629 = ssub.s32 %s13, 2
        // Predicated region
        $region45: #{tpu_custom_call.1} parent=43 // pred_check
          %p630 = pneg %p110
        $region46: #{tpu_custom_call.1} parent=43 // pred_check_branch
          %632 = sbr.rel (%p630) target = $region48
        $region47: #{tpu_custom_call.1} parent=43 // pred_region
          %s633 = sand.u32 %s95, 1
          %s634 = scalar_lea.sflag [#allocation5], %s633
          %s635 = sand.u32 %s95, 1
          %s636 = smul.addr %s635, 96
          %s637 = scalar_lea.vmem [#allocation6], %s636
          %639 = dma.done %s634, 1536
        $region48: #{tpu_custom_call.1} parent=43 // pred_fallthru
          _
      $region44: #{tpu_custom_call.1} parent=5 // pred_fallthru
        _
    $region6: #{tpu_custom_call.1} parent=1 // loop_footer
      %s17 = sadd.s32 1, %s13
    $region7: #{tpu_custom_call.1} parent=1 // loop_footer_branch
      %12 = sbr.rel target = $region3
    $region8: #{tpu_custom_call.1} parent=1 // loop_exit
      _
    %640 = vsyncpa [#allocation4], 1
    %s641 = scalar_lea.sflag [#allocation4], 1
    %642 = vsyncpa %s641, 1
    %643 = vsyncpa [#allocation5], 1
    %s644 = scalar_lea.sflag [#allocation5], 1
    %645 = vsyncpa %s644, 1

</llo_original>
